<compile_context>
chip_gen: v7x
topology: tpu7x:2x2x1
jax: 0.10.0
libtpu: 0.0.40
codegen_flags: <defaults>
</compile_context>

<pallas_src>
import math

import numpy as np
import jax
import jax.numpy as jnp
from jax.experimental import pallas as pl
from jax.experimental.pallas import tpu as pltpu


# ----------------------------- Pallas kernel -------------------------------


def _make_normalize_resize_pad_kernel(out_h: int, out_w: int):
    """Build the per-image kernel (out_h/out_w are static per image)."""

    def kernel(inv_std_ref, neg_mean_std_ref, img_ref, wwT_ref, wh_ref,
               batch_alias_ref, out_ref):
        # inv_std_ref, neg_mean_std_ref : (C,) f32 in SMEM
        # img_ref : (C, H_in, W_in) bf16  resident image (constant index map)
        # wwT_ref : (W_in, pad_W)  bf16   resident column-interp matrix (transposed)
        # wh_ref  : (TILE_H, H_in) bf16   row-interp tile for this grid step
        # batch_alias_ref : HBM ref aliased with the output, never touched here
        # out_ref : (1, C, TILE_H, pad_W) f32 block of the batched output
        del batch_alias_ref
        n_ch = img_ref.shape[0]
        tile_h = wh_ref.shape[0]
        pad_w = out_ref.shape[3]

        wh = wh_ref[...]                                            # (TILE_H, H_in)
        # First matmul per channel; second matmul fused across channels so WwT
        # is pushed to the MXU once per grid step with M = C*TILE_H.
        tmp = jnp.concatenate(
            [jnp.dot(wh, img_ref[c], preferred_element_type=jnp.float32)
             for c in range(n_ch)],
            axis=0)                                                 # (C*TILE_H, W_in) f32
        res = jnp.dot(tmp.astype(jnp.bfloat16), wwT_ref[...],
                      preferred_element_type=jnp.float32)           # (C*TILE_H, pad_W) f32
        res = res.reshape(n_ch, tile_h, pad_w)

        # Valid region = resized extent; outside it is batch_images() zero pad.
        row0 = pl.program_id(0) * tile_h
        rows = row0 + jax.lax.broadcasted_iota(jnp.int32, (tile_h, pad_w), 0)
        cols = jax.lax.broadcasted_iota(jnp.int32, (tile_h, pad_w), 1)
        valid = (rows < out_h) & (cols < out_w)
        for c in range(n_ch):  # static unroll; C is small (e.g. 3)
            out_ref[0, c] = jnp.where(
                valid, inv_std_ref[c] * res[c] + neg_mean_std_ref[c], 0.0)

    return kernel


# ------------------------------ glue (JAX) ----------------------------------


def _bilinear_matrix(out_size: int, in_size: int, pad_to: int) -> jnp.ndarray:
    """(pad_to, in_size) f32 matrix; rows [0, out_size) apply PyTorch bilinear
    (align_corners=False) interpolation, rows [out_size, pad_to) are zero."""
    i = np.arange(out_size, dtype=np.float64)
    scale = float(in_size) / float(out_size)
    src = np.clip((i + 0.5) * scale - 0.5, 0.0, float(in_size - 1))
    i0 = np.floor(src).astype(np.int64)
    i1 = np.minimum(i0 + 1, in_size - 1)
    w1 = (src - i0).astype(np.float32)
    w0 = (1.0 - w1).astype(np.float32)
    mat = np.zeros((pad_to, in_size), np.float32)
    rows = np.arange(out_size)
    np.add.at(mat, (rows, i0), w0)
    np.add.at(mat, (rows, i1), w1)
    return jnp.asarray(mat)


def _vmem_footprint_bytes(tile_h: int, C: int, H: int, W: int, pad_w: int) -> int:
    """Honest per-call VMEM footprint: resident blocks, streamed (double
    buffered) blocks, and the in-kernel value temporaries."""
    bf16, f32 = 2, 4
    resident = 2 * C * H * W * bf16 + 2 * W * pad_w * bf16            # image + WwT
    streamed = 2 * tile_h * H * bf16 + 2 * C * tile_h * pad_w * f32   # Wh tile + out tile
    transient = (C * tile_h * W * (f32 + bf16)                        # tmp f32 + bf16 repack
                 + C * tile_h * pad_w * f32                           # fused 2nd-matmul result
                 + 2 * tile_h * pad_w * f32)                          # mask / where temporaries
    return resident + streamed + transient


def _pick_tile_h(pad_h: int, H: int, W: int, C: int, pad_w: int,
                 budget_bytes: int = 48 << 20, max_tile: int = 256) -> int:
    """Largest multiple-of-8 output-row tile whose footprint fits a v7x-safe
    budget; capped so the grid has >= 4 steps (megacore balance).  The grid uses
    pl.cdiv, so the tile need not divide pad_h."""
    cap = min(max_tile, pad_h)
    if pad_h >= 32:
        cap = min(cap, max(8, ((pad_h // 4) // 8) * 8))
    best = 8
    for t in range(8, cap + 1, 8):
        if _vmem_footprint_bytes(t, C, H, W, pad_w) <= budget_bytes:
            best = t
    return best


def resize_boxes(boxes, original_size, new_size):
    """Scale [N, 4] xyxy boxes from original_size (h, w) to new_size (h, w)."""
    ratio_h = jnp.float32(new_size[0]) / jnp.float32(original_size[0])
    ratio_w = jnp.float32(new_size[1]) / jnp.float32(original_size[1])
    xmin, ymin, xmax, ymax = jnp.split(boxes, 4, axis=1)
    return jnp.concatenate(
        [xmin * ratio_w, ymin * ratio_h, xmax * ratio_w, ymax * ratio_h], axis=1
    )


class GeneralizedRCNNTransformPallas:
    def __init__(self, min_size, max_size, image_mean, image_std,
                 size_divisible=32, fixed_size=None):
        if not isinstance(min_size, (list, tuple)):
            min_size = (min_size,)
        self.min_size = min_size
        self.max_size = max_size
        self.image_mean = image_mean
        self.image_std = image_std
        self.size_divisible = size_divisible
        self.fixed_size = fixed_size
        self.training = False
        # TODO(synk): training-mode random min_size selection (torch_choice) not implemented.

    # ---- resize target size (matches _resize_image_and_masks, eager path) ----
    def _resized_size(self, h: int, w: int):
        if self.fixed_size is not None:
            return int(self.fixed_size[1]), int(self.fixed_size[0])
        size = float(self.min_size[-1])
        min_s = float(min(h, w))
        max_s = float(max(h, w))
        # torch computes the scale in float32, then floor(in_dim * scale)
        scale = float(min(np.float32(size) / np.float32(min_s),
                          np.float32(self.max_size) / np.float32(max_s)))
        return int(math.floor(h * scale)), int(math.floor(w * scale))

    # ---- fused normalize + bilinear resize + pad, written into the batch ----
    def _normalize_resize_pad(self, image, out_h, out_w, pad_h, pad_w,
                              batch_buf, img_idx):
        C, H, W = image.shape
        tile_h = _pick_tile_h(pad_h, H, W, C, pad_w)
        n_tiles = pl.cdiv(pad_h, tile_h)

        wh = _bilinear_matrix(out_h, H, pad_h).astype(jnp.bfloat16)      # (pad_h, H)
        wwT = _bilinear_matrix(out_w, W, pad_w).T.astype(jnp.bfloat16)   # (W, pad_w)
        inv_std = 1.0 / jnp.asarray(self.image_std, jnp.float32)         # (C,)
        neg_mean_std = -jnp.asarray(self.image_mean, jnp.float32) * inv_std
        img_bf16 = image.astype(jnp.bfloat16)   # resident bf16; normalization folded out

        footprint = _vmem_footprint_bytes(tile_h, C, H, W, pad_w)
        vmem_limit = int(min(112 << 20, max(32 << 20, footprint + (16 << 20))))

        smem = pl.BlockSpec(memory_space=pltpu.MemorySpace.SMEM)
        n_in = 6  # inv_std, -mean/std, image, WwT, Wh, aliased batch buffer

        return pl.pallas_call(
            _make_normalize_resize_pad_kernel(out_h, out_w),
            out_shape=jax.ShapeDtypeStruct(batch_buf.shape, batch_buf.dtype),
            grid=(n_tiles,),
            in_specs=[
                smem,                                              # inv_std  (C,) SMEM
                smem,                                              # -mean/std (C,) SMEM
                pl.BlockSpec((C, H, W), lambda i: (0, 0, 0)),      # image (resident)
                pl.BlockSpec((W, pad_w), lambda i: (0, 0)),        # WwT   (resident)
                pl.BlockSpec((tile_h, H), lambda i: (i, 0)),       # Wh row tile (streamed)
                pl.BlockSpec(memory_space=pl.ANY),                 # aliased batch buffer
            ],
            out_specs=pl.BlockSpec((1, C, tile_h, pad_w),
                                   lambda i: (img_idx, 0, i, 0)),
            input_output_aliases={n_in - 1: 0},
            compiler_params=pltpu.CompilerParams(
                dimension_semantics=("parallel",),
                vmem_limit_bytes=vmem_limit),
        )(inv_std, neg_mean_std, img_bf16, wwT, wh, batch_buf)

    # ---- forward: list of CHW images -> (batched NCHW, image_sizes), targets ----
    def forward(self, images, targets=None):
        assert len(images) > 0
        orig_sizes, image_sizes = [], []
        for img in images:
            assert img.ndim == 3, "images must be a list of 3-D [C, H, W] tensors"
            _, H, W = img.shape
            orig_sizes.append((H, W))
            image_sizes.append(self._resized_size(H, W))

        C = images[0].shape[0]
        for img in images:
            assert img.shape[0] == C, "all images must share the channel count"

        stride = float(self.size_divisible)
        pad_h = int(math.ceil(max(s[0] for s in image_sizes) / stride) * stride)
        pad_w = int(math.ceil(max(s[1] for s in image_sizes) / stride) * stride)

        # Preallocated batch buffer; each per-image call writes its slot in place
        # via input_output_aliases (no per-image slice / jnp.stack HBM passes).
        batched = jnp.zeros((len(images), C, pad_h, pad_w), jnp.float32)

        out_targets = None if targets is None else list(targets)
        for i, img in enumerate(images):
            oh, ow = image_sizes[i]
            batched = self._normalize_resize_pad(img, oh, ow, pad_h, pad_w,
                                                 batched, i)
            if out_targets is not None and out_targets[i] is not None:
                t = dict(out_targets[i])
                if "boxes" in t:
                    t["boxes"] = resize_boxes(t["boxes"], orig_sizes[i], (oh, ow))
                # TODO(synk): target 'masks' bilinear resizing not implemented.
                out_targets[i] = t

        # mimic ImageList: (tensors, image_sizes)
        return (batched, image_sizes), out_targets


# --------------------------------- main --------------------------------------

if __name__ == "__main__":
    key = jax.random.PRNGKey(0)
    k1, k2, k3, k4 = jax.random.split(key, 4)

    # Two small CHW images of different spatial sizes (variable-size inputs).
    img0 = jax.random.uniform(k1, (3, 16, 20), dtype=jnp.float32)
    img1 = jax.random.uniform(k2, (3, 24, 18), dtype=jnp.float32)

    # Simple targets with boxes (xyxy, float32).
    targets = [
        {"boxes": jax.random.uniform(k3, (4, 4), dtype=jnp.float32) * 16.0},
        {"boxes": jax.random.uniform(k4, (5, 4), dtype=jnp.float32) * 18.0},
    ]

    transform = GeneralizedRCNNTransformPallas(
        min_size=32, max_size=64,
        image_mean=[0.485, 0.456, 0.406],
        image_std=[0.229, 0.224, 0.225],
        size_divisible=32,
    )

    (batched_imgs, image_sizes), out_targets = transform.forward([img0, img1], targets)
    batched_imgs = jax.block_until_ready(batched_imgs)
    for t in out_targets:
        jax.block_until_ready(t["boxes"])

    # sanity: batched shape is (N, C, pad_H, pad_W) with H/W multiples of 32
    assert batched_imgs.shape[0] == 2 and batched_imgs.shape[1] == 3
    assert batched_imgs.shape[2] % 32 == 0 and batched_imgs.shape[3] % 32 == 0
    assert len(image_sizes) == 2

    # numerical check vs a pure-JAX reference of the same transform
    mean = jnp.asarray(transform.image_mean, jnp.float32)
    std = jnp.asarray(transform.image_std, jnp.float32)
    pad_h, pad_w = batched_imgs.shape[2], batched_imgs.shape[3]
    for i, img in enumerate([img0, img1]):
        oh, ow = image_sizes[i]
        _, H, W = img.shape
        wh_f32 = _bilinear_matrix(oh, H, pad_h)
        ww_f32 = _bilinear_matrix(ow, W, pad_w)
        norm = (img - mean[:, None, None]) / std[:, None, None]
        ref = jnp.einsum("ph,chw,qw->cpq", wh_f32, norm, ww_f32)
        np.testing.assert_allclose(np.asarray(batched_imgs[i]), np.asarray(ref),
                                   atol=0.1, rtol=0)

    print("KERNEL_OK")
</pallas_src>

<mosaic_0001>
module attributes {stable_mosaic.version = 11 : i64} {
  func.func @kernel(%arg0: i32, %arg1: memref<3xf32, #tpu.memory_space<smem>>, %arg2: memref<3xf32, #tpu.memory_space<smem>>, %arg3: memref<3x16x20xbf16, #tpu.memory_space<vmem>>, %arg4: memref<20x64xbf16, #tpu.memory_space<vmem>>, %arg5: memref<16x16xbf16, #tpu.memory_space<vmem>>, %arg6: memref<2x3x64x64xf32, #tpu.memory_space<any>>, %arg7: memref<1x3x16x64xf32, #tpu.memory_space<vmem>>) attributes {dimension_semantics = [#tpu.dimension_semantics<parallel>], iteration_bounds = array<i64: 4>, scalar_prefetch = 0 : i64, scratch_operands = 0 : i64, tpu.core_type = #tpu.core_type<tc>, window_params = [{transform_indices = @transform_0, window_bounds = array<i64: 3>}, {transform_indices = @transform_1, window_bounds = array<i64: 3>}, {pipeline_mode = #tpu.pipeline_mode<synchronous>, transform_indices = @transform_2, window_bounds = array<i64: 3, 16, 20>}, {pipeline_mode = #tpu.pipeline_mode<synchronous>, transform_indices = @transform_3, window_bounds = array<i64: 20, 64>}, {transform_indices = @transform_4, window_bounds = array<i64: 16, 16>}, {}, {transform_indices = @transform_6, window_bounds = array<i64: 1, 3, 16, 64>}]} {
    %c0 = arith.constant 0 : index
    %c0_0 = arith.constant 0 : index
    %0 = vector.load %arg5[%c0, %c0_0] : memref<16x16xbf16, #tpu.memory_space<vmem>>, vector<16x16xbf16>
    %c0_1 = arith.constant 0 : index
    %c0_2 = arith.constant 0 : index
    %c0_3 = arith.constant 0 : index
    %1 = vector.load %arg3[%c0_1, %c0_2, %c0_3] : memref<3x16x20xbf16, #tpu.memory_space<vmem>>, vector<1x16x20xbf16>
    %2 = vector.shape_cast %1 : vector<1x16x20xbf16> to vector<16x20xbf16>
    %cst = arith.constant dense<0.000000e+00> : vector<16x20xf32>
    %3 = tpu.matmul %0, %2, %cst {dimension_numbers = #tpu.dot_dimension_numbers<[1], [0], [0], [1], [0, 0, 1, 1], [], []>} : vector<16x16xbf16>, vector<16x20xbf16>, vector<16x20xf32> -> vector<16x20xf32>
    %c1 = arith.constant 1 : index
    %c0_4 = arith.constant 0 : index
    %c0_5 = arith.constant 0 : index
    %4 = vector.load %arg3[%c1, %c0_4, %c0_5] : memref<3x16x20xbf16, #tpu.memory_space<vmem>>, vector<1x16x20xbf16>
    %5 = vector.shape_cast %4 : vector<1x16x20xbf16> to vector<16x20xbf16>
    %cst_6 = arith.constant dense<0.000000e+00> : vector<16x20xf32>
    %6 = tpu.matmul %0, %5, %cst_6 {dimension_numbers = #tpu.dot_dimension_numbers<[1], [0], [0], [1], [0, 0, 1, 1], [], []>} : vector<16x16xbf16>, vector<16x20xbf16>, vector<16x20xf32> -> vector<16x20xf32>
    %c2 = arith.constant 2 : index
    %c0_7 = arith.constant 0 : index
    %c0_8 = arith.constant 0 : index
    %7 = vector.load %arg3[%c2, %c0_7, %c0_8] : memref<3x16x20xbf16, #tpu.memory_space<vmem>>, vector<1x16x20xbf16>
    %8 = vector.shape_cast %7 : vector<1x16x20xbf16> to vector<16x20xbf16>
    %cst_9 = arith.constant dense<0.000000e+00> : vector<16x20xf32>
    %9 = tpu.matmul %0, %8, %cst_9 {dimension_numbers = #tpu.dot_dimension_numbers<[1], [0], [0], [1], [0, 0, 1, 1], [], []>} : vector<16x16xbf16>, vector<16x20xbf16>, vector<16x20xf32> -> vector<16x20xf32>
    %10 = tpu.concatenate %3, %6, %9 in 0 : vector<16x20xf32>, vector<16x20xf32>, vector<16x20xf32> -> vector<48x20xf32>
    %11 = arith.truncf %10 : vector<48x20xf32> to vector<48x20xbf16>
    %c0_10 = arith.constant 0 : index
    %c0_11 = arith.constant 0 : index
    %12 = vector.load %arg4[%c0_10, %c0_11] : memref<20x64xbf16, #tpu.memory_space<vmem>>, vector<20x64xbf16>
    %cst_12 = arith.constant dense<0.000000e+00> : vector<48x64xf32>
    %13 = tpu.matmul %11, %12, %cst_12 {dimension_numbers = #tpu.dot_dimension_numbers<[1], [0], [0], [1], [0, 0, 1, 1], [], []>} : vector<48x20xbf16>, vector<20x64xbf16>, vector<48x64xf32> -> vector<48x64xf32>
    %14 = vector.shape_cast %13 : vector<48x64xf32> to vector<3x16x64xf32>
    %c16_i32 = arith.constant 16 : i32
    %15 = arith.muli %arg0, %c16_i32 : i32
    %16 = tpu.iota {dimensions = array<i32: 0>} : vector<16x64xi32>
    %17 = vector.broadcast %15 : i32 to vector<16x64xi32>
    %18 = arith.addi %17, %16 : vector<16x64xi32>
    %19 = tpu.iota {dimensions = array<i32: 1>} : vector<16x64xi32>
    %c32_i32 = arith.constant 32 : i32
    %20 = vector.broadcast %c32_i32 : i32 to vector<16x64xi32>
    %21 = arith.cmpi slt, %18, %20 : vector<16x64xi32>
    %c40_i32 = arith.constant 40 : i32
    %22 = vector.broadcast %c40_i32 : i32 to vector<16x64xi32>
    %23 = arith.cmpi slt, %19, %22 : vector<16x64xi32>
    %24 = arith.andi %21, %23 : vector<16x64xi1>
    %c0_13 = arith.constant 0 : index
    %25 = memref.load %arg1[%c0_13] : memref<3xf32, #tpu.memory_space<smem>>
    %26 = vector.extract_strided_slice %14 {offsets = [0, 0, 0], sizes = [1, 16, 64], strides = [1, 1, 1]} : vector<3x16x64xf32> to vector<1x16x64xf32>
    %27 = vector.shape_cast %26 : vector<1x16x64xf32> to vector<16x64xf32>
    %28 = vector.broadcast %25 : f32 to vector<16x64xf32>
    %29 = arith.mulf %28, %27 : vector<16x64xf32>
    %c0_14 = arith.constant 0 : index
    %30 = memref.load %arg2[%c0_14] : memref<3xf32, #tpu.memory_space<smem>>
    %31 = vector.broadcast %30 : f32 to vector<16x64xf32>
    %32 = arith.addf %29, %31 : vector<16x64xf32>
    %cst_15 = arith.constant 0.000000e+00 : f32
    %33 = vector.broadcast %cst_15 : f32 to vector<16x64xf32>
    %34 = arith.select %24, %32, %33 : vector<16x64xi1>, vector<16x64xf32>
    %c0_16 = arith.constant 0 : index
    %c0_17 = arith.constant 0 : index
    %c0_18 = arith.constant 0 : index
    %c0_19 = arith.constant 0 : index
    %35 = vector.load %arg7[%c0_16, %c0_17, %c0_18, %c0_19] : memref<1x3x16x64xf32, #tpu.memory_space<vmem>>, vector<1x1x16x64xf32>
    %36 = vector.shape_cast %35 : vector<1x1x16x64xf32> to vector<16x64xf32>
    %37 = vector.shape_cast %34 : vector<16x64xf32> to vector<1x1x16x64xf32>
    tpu.vector_store %arg7[%c0_16, %c0_17, %c0_18, %c0_19], %37 {strides = array<i32>} : memref<1x3x16x64xf32, #tpu.memory_space<vmem>>, vector<1x1x16x64xf32>,
    %c1_20 = arith.constant 1 : index
    %38 = memref.load %arg1[%c1_20] : memref<3xf32, #tpu.memory_space<smem>>
    %39 = vector.extract_strided_slice %14 {offsets = [1, 0, 0], sizes = [1, 16, 64], strides = [1, 1, 1]} : vector<3x16x64xf32> to vector<1x16x64xf32>
    %40 = vector.shape_cast %39 : vector<1x16x64xf32> to vector<16x64xf32>
    %41 = vector.broadcast %38 : f32 to vector<16x64xf32>
    %42 = arith.mulf %41, %40 : vector<16x64xf32>
    %c1_21 = arith.constant 1 : index
    %43 = memref.load %arg2[%c1_21] : memref<3xf32, #tpu.memory_space<smem>>
    %44 = vector.broadcast %43 : f32 to vector<16x64xf32>
    %45 = arith.addf %42, %44 : vector<16x64xf32>
    %cst_22 = arith.constant 0.000000e+00 : f32
    %46 = vector.broadcast %cst_22 : f32 to vector<16x64xf32>
    %47 = arith.select %24, %45, %46 : vector<16x64xi1>, vector<16x64xf32>
    %c0_23 = arith.constant 0 : index
    %c1_24 = arith.constant 1 : index
    %c0_25 = arith.constant 0 : index
    %c0_26 = arith.constant 0 : index
    %48 = vector.load %arg7[%c0_23, %c1_24, %c0_25, %c0_26] : memref<1x3x16x64xf32, #tpu.memory_space<vmem>>, vector<1x1x16x64xf32>
    %49 = vector.shape_cast %48 : vector<1x1x16x64xf32> to vector<16x64xf32>
    %50 = vector.shape_cast %47 : vector<16x64xf32> to vector<1x1x16x64xf32>
    tpu.vector_store %arg7[%c0_23, %c1_24, %c0_25, %c0_26], %50 {strides = array<i32>} : memref<1x3x16x64xf32, #tpu.memory_space<vmem>>, vector<1x1x16x64xf32>,
    %c2_27 = arith.constant 2 : index
    %51 = memref.load %arg1[%c2_27] : memref<3xf32, #tpu.memory_space<smem>>
    %52 = vector.extract_strided_slice %14 {offsets = [2, 0, 0], sizes = [1, 16, 64], strides = [1, 1, 1]} : vector<3x16x64xf32> to vector<1x16x64xf32>
    %53 = vector.shape_cast %52 : vector<1x16x64xf32> to vector<16x64xf32>
    %54 = vector.broadcast %51 : f32 to vector<16x64xf32>
    %55 = arith.mulf %54, %53 : vector<16x64xf32>
    %c2_28 = arith.constant 2 : index
    %56 = memref.load %arg2[%c2_28] : memref<3xf32, #tpu.memory_space<smem>>
    %57 = vector.broadcast %56 : f32 to vector<16x64xf32>
    %58 = arith.addf %55, %57 : vector<16x64xf32>
    %cst_29 = arith.constant 0.000000e+00 : f32
    %59 = vector.broadcast %cst_29 : f32 to vector<16x64xf32>
    %60 = arith.select %24, %58, %59 : vector<16x64xi1>, vector<16x64xf32>
    %c0_30 = arith.constant 0 : index
    %c2_31 = arith.constant 2 : index
    %c0_32 = arith.constant 0 : index
    %c0_33 = arith.constant 0 : index
    %61 = vector.load %arg7[%c0_30, %c2_31, %c0_32, %c0_33] : memref<1x3x16x64xf32, #tpu.memory_space<vmem>>, vector<1x1x16x64xf32>
    %62 = vector.shape_cast %61 : vector<1x1x16x64xf32> to vector<16x64xf32>
    %63 = vector.shape_cast %60 : vector<16x64xf32> to vector<1x1x16x64xf32>
    tpu.vector_store %arg7[%c0_30, %c2_31, %c0_32, %c0_33], %63 {strides = array<i32>} : memref<1x3x16x64xf32, #tpu.memory_space<vmem>>, vector<1x1x16x64xf32>,
    return
  }
  func.func @transform_0(%arg0: i32) -> i32 {
    %c0_i32 = arith.constant 0 : i32
    %c0_i32_0 = arith.constant 0 : i32
    return %c0_i32 : i32
  }
  func.func @transform_1(%arg0: i32) -> i32 {
    %c0_i32 = arith.constant 0 : i32
    %c0_i32_0 = arith.constant 0 : i32
    return %c0_i32 : i32
  }
  func.func @transform_2(%arg0: i32) -> (i32, i32, i32) {
    %c0_i32 = arith.constant 0 : i32
    %c0_i32_0 = arith.constant 0 : i32
    %c0_i32_1 = arith.constant 0 : i32
    %c0_i32_2 = arith.constant 0 : i32
    return %c0_i32, %c0_i32_0, %c0_i32_1 : i32, i32, i32
  }
  func.func @transform_3(%arg0: i32) -> (i32, i32) {
    %c0_i32 = arith.constant 0 : i32
    %c0_i32_0 = arith.constant 0 : i32
    %c0_i32_1 = arith.constant 0 : i32
    return %c0_i32, %c0_i32_0 : i32, i32
  }
  func.func @transform_4(%arg0: i32) -> (i32, i32) {
    %c0_i32 = arith.constant 0 : i32
    %c0_i32_0 = arith.constant 0 : i32
    return %arg0, %c0_i32 : i32, i32
  }
  func.func @transform_6(%arg0: i32) -> (i32, i32, i32, i32) {
    %c0_i32 = arith.constant 0 : i32
    %c0_i32_0 = arith.constant 0 : i32
    %c0_i32_1 = arith.constant 0 : i32
    %c0_i32_2 = arith.constant 0 : i32
    return %c0_i32, %c0_i32_0, %arg0, %c0_i32_1 : i32, i32, i32, i32
  }
}

</mosaic_0001>

<llo_original>
// kernel: tpu_custom_call.1
$region0: #{tpu_custom_call.1}
  #allocation0 [shape = 'u32[]', space=smem, size = 0x4, offset = 0x4, fixed_abs, tag = 'smem constant byte address 0x4 - core index']
  #allocation1 [shape = 'u32[144,128]{1,0:T(1,128)}', space=vmem, size = 0x12000, scoped, tag = 'internal scratch']
  #allocation8 [shape = 's32[]', space=sflag, size = 0x4, offset = 0, fixed_abs, tag = 'sflag constant byte address 0x0 - dummy sync flag']
  %s0 = inlined_call_operand.vmem [shape: f32[3], index: 0, kind: input, shape index: {}]
  %s1 = inlined_call_operand.vmem [shape: f32[3], index: 1, kind: input, shape index: {}]
  %s2 = inlined_call_operand.vmem [shape: bf16[3,16,20], index: 2, kind: input, shape index: {}]
  %s3 = inlined_call_operand.vmem [shape: bf16[20,64], index: 3, kind: input, shape index: {}]
  %s4 = inlined_call_operand.vmem [shape: bf16[64,16], index: 4, kind: input, shape index: {}]
  %s5 = inlined_call_operand.hbm [shape: f32[2,3,64,64], index: 5, kind: input, shape index: {}, may-alias: {5,6}]
  %s6 = inlined_call_operand.hbm [shape: f32[2,3,64,64], index: 6, kind: output, shape index: {}, may-alias: {5,6}]
  %s7 = sld [smem:[#allocation0]]
  $region61: #{tpu_custom_call.1} parent=0
    _
  %s9 = ssub.s32 1, %s7
  %s10 = scalar_select 0, %s9, %s7
  $region1: #{tpu_custom_call.1} parent=0
    #allocation2 [shape = 'u8[512]{0}', space=smem, size = 0x200, scoped, tag = 'input window, operand 0, single buffered']
    #allocation3 [shape = 's32[2]{0}', space=sflag, size = 0x8, scoped, tag = 'scoped memory for tpu_custom_call.1']
    #allocation4 [shape = 's32[2]{0}', space=sflag, size = 0x8, scoped, tag = 'scoped memory for tpu_custom_call.1']
    #allocation5 [shape = 'u8[512]{0}', space=smem, size = 0x200, scoped, tag = 'input window, operand 1, single buffered']
    #allocation6 [shape = 's32[1]{0}', space=sflag, size = 0x4, scoped, tag = 'scoped memory for tpu_custom_call.1']
    #allocation7 [shape = 'u8[49152]{0}', space=vmem, size = 0xc000, scoped, tag = 'output window, operand 0']
    %11 = vsyncpa [#allocation4], 0
    %12 = vsyncpa [#allocation6], 0
    %13 = vsyncpa [#allocation3], 0
    %s14 = scalar_lea.sflag [#allocation3], 1
    %15 = vsyncpa %s14, 0
    loop: start=0, step=1, limit=6
    $region2: #{tpu_custom_call.1} parent=1 // loop_pre_header
      _
    $region3: #{tpu_custom_call.1} parent=1 // loop_header
      %s17 = sphi 0, %s21
      %p18 = scmp.ge.s32.totalorder %s17, 6
      %s25 = sphi 0, %s25
      %s27 = sphi 0, %s25
      %s28 = sphi 0, %s27
      %s42 = sphi 0, %s28
      %s46 = sphi 0, %s46
      %s48 = sphi 0, %s46
      %s49 = sphi 0, %s48
      %s63 = sphi 0, %s49
      %s67 = sphi 0, %s67
      %s69 = sphi 0, %s67
      %s70 = sphi 0, %s69
      %s84 = sphi 0, %s70
      %s88 = sphi 0, %s88
      %s90 = sphi 0, %s88
      %s91 = sphi 0, %s90
      %s105 = sphi 0, %s91
      %s111 = sphi 0, %s113
      %s114 = sphi 0, %s111
      %s115 = sphi 0, %s114
      %s131 = sphi 0, %s115
      %s137 = sphi 0, %s139
      %s140 = sphi 0, %s137
      %s141 = sphi 0, %s140
      %s157 = sphi 0, %s141
    $region4: #{tpu_custom_call.1} parent=1 // loop_header_branch
      %20 = sbr.rel (%p18) target = $region8
    $region5: #{tpu_custom_call.1} parent=1 // loop_body
      %s22 = ssub.s32 %s17, 1
      %s23 = ssub.s32 %s17, 2
      %s24 = sadd.s32 %s17, 1
      %s26 = sadd.s32 %s25, 1
      %p29 = scmp.eq.s32.totalorder %s17, 3
      %p30 = scmp.ne.s32.totalorder %s25, %s27
      %p31 = scmp.eq.s32.totalorder %s17, 0
      %p32 = por %p30, %p31
      %p33 = scmp.ne.s32.totalorder %s25, %s27
      %p34 = scmp.eq.s32.totalorder %s22, 3
      %p35 = por %p33, %p34
      %p36 = scmp.ne.s32.totalorder %s27, %s28
      %p37 = scmp.eq.s32.totalorder %s22, 0
      %p38 = por %p36, %p37
      %p39 = scmp.ne.s32.totalorder %s27, %s28
      %p40 = scmp.eq.s32.totalorder %s23, 3
      %p41 = por %p39, %p40
      %p43 = scmp.ne.s32.totalorder %s28, %s42
      %p44 = scmp.eq.s32.totalorder %s23, 0
      %p45 = por %p43, %p44
      %s47 = sadd.s32 %s46, 1
      %p50 = scmp.eq.s32.totalorder %s17, 3
      %p51 = scmp.ne.s32.totalorder %s46, %s48
      %p52 = scmp.eq.s32.totalorder %s17, 0
      %p53 = por %p51, %p52
      %p54 = scmp.ne.s32.totalorder %s46, %s48
      %p55 = scmp.eq.s32.totalorder %s22, 3
      %p56 = por %p54, %p55
      %p57 = scmp.ne.s32.totalorder %s48, %s49
      %p58 = scmp.eq.s32.totalorder %s22, 0
      %p59 = por %p57, %p58
      %p60 = scmp.ne.s32.totalorder %s48, %s49
      %p61 = scmp.eq.s32.totalorder %s23, 3
      %p62 = por %p60, %p61
      %p64 = scmp.ne.s32.totalorder %s49, %s63
      %p65 = scmp.eq.s32.totalorder %s23, 0
      %p66 = por %p64, %p65
      %s68 = sadd.s32 %s67, 1
      %p71 = scmp.eq.s32.totalorder %s17, 3
      %p72 = scmp.ne.s32.totalorder %s67, %s69
      %p73 = scmp.eq.s32.totalorder %s17, 0
      %p74 = por %p72, %p73
      %p75 = scmp.ne.s32.totalorder %s67, %s69
      %p76 = scmp.eq.s32.totalorder %s22, 3
      %p77 = por %p75, %p76
      %p78 = scmp.ne.s32.totalorder %s69, %s70
      %p79 = scmp.eq.s32.totalorder %s22, 0
      %p80 = por %p78, %p79
      %p81 = scmp.ne.s32.totalorder %s69, %s70
      %p82 = scmp.eq.s32.totalorder %s23, 3
      %p83 = por %p81, %p82
      %p85 = scmp.ne.s32.totalorder %s70, %s84
      %p86 = scmp.eq.s32.totalorder %s23, 0
      %p87 = por %p85, %p86
      %s89 = sadd.s32 %s88, 1
      %p92 = scmp.eq.s32.totalorder %s17, 3
      %p93 = scmp.ne.s32.totalorder %s88, %s90
      %p94 = scmp.eq.s32.totalorder %s17, 0
      %p95 = por %p93, %p94
      %p96 = scmp.ne.s32.totalorder %s88, %s90
      %p97 = scmp.eq.s32.totalorder %s22, 3
      %p98 = por %p96, %p97
      %p99 = scmp.ne.s32.totalorder %s90, %s91
      %p100 = scmp.eq.s32.totalorder %s22, 0
      %p101 = por %p99, %p100
      %p102 = scmp.ne.s32.totalorder %s90, %s91
      %p103 = scmp.eq.s32.totalorder %s23, 3
      %p104 = por %p102, %p103
      %p106 = scmp.ne.s32.totalorder %s91, %s105
      %p107 = scmp.eq.s32.totalorder %s23, 0
      %p108 = por %p106, %p107
      %s109 = ssub.s32 %s17, %s24
      %p110 = scmp.eq.s32.totalorder %s109, 0
      %s112 = sadd.s32 %s111, 1
      %s113 = scalar_select %p110, %s111, %s112
      %p116 = pneg %p110
      %p117 = scmp.eq.s32.totalorder %s17, 3
      %p118 = por %p116, %p117
      %p119 = scmp.ne.s32.totalorder %s111, %s114
      %p120 = scmp.eq.s32.totalorder %s17, 0
      %p121 = por %p119, %p120
      %p122 = scmp.ne.s32.totalorder %s111, %s114
      %p123 = scmp.eq.s32.totalorder %s22, 3
      %p124 = por %p122, %p123
      %p125 = scmp.ne.s32.totalorder %s114, %s115
      %p126 = scmp.eq.s32.totalorder %s22, 0
      %p127 = por %p125, %p126
      %p128 = scmp.ne.s32.totalorder %s114, %s115
      %p129 = scmp.eq.s32.totalorder %s23, 3
      %p130 = por %p128, %p129
      %p132 = scmp.ne.s32.totalorder %s115, %s131
      %p133 = scmp.eq.s32.totalorder %s23, 0
      %p134 = por %p132, %p133
      %s135 = ssub.s32 %s17, %s24
      %p136 = scmp.eq.s32.totalorder %s135, 0
      %s138 = sadd.s32 %s137, 1
      %s139 = scalar_select %p136, %s137, %s138
      %p142 = pneg %p136
      %p143 = scmp.eq.s32.totalorder %s17, 3
      %p144 = por %p142, %p143
      %p145 = scmp.ne.s32.totalorder %s137, %s140
      %p146 = scmp.eq.s32.totalorder %s17, 0
      %p147 = por %p145, %p146
      %p148 = scmp.ne.s32.totalorder %s137, %s140
      %p149 = scmp.eq.s32.totalorder %s22, 3
      %p150 = por %p148, %p149
      %p151 = scmp.ne.s32.totalorder %s140, %s141
      %p152 = scmp.eq.s32.totalorder %s22, 0
      %p153 = por %p151, %p152
      %p154 = scmp.ne.s32.totalorder %s140, %s141
      %p155 = scmp.eq.s32.totalorder %s23, 3
      %p156 = por %p154, %p155
      %p158 = scmp.ne.s32.totalorder %s141, %s157
      %p159 = scmp.eq.s32.totalorder %s23, 0
      %p160 = por %p158, %p159
      %p161 = scmp.le.s32.totalorder 1, %s17
      %p162 = scmp.lt.s32.totalorder %s17, 5
      %p163 = pnand %p161, %p162
      %p164 = pneg %p163
      // Predicated region
      $region9: #{tpu_custom_call.1} parent=5 // pred_check
        _
      $region10: #{tpu_custom_call.1} parent=5 // pred_check_branch
        %166 = sbr.rel (%p163) target = $region12
      $region11: #{tpu_custom_call.1} parent=5 // pred_region
        %s167 = ssub.s32 %s17, 1
        // Predicated region
        $region13: #{tpu_custom_call.1} parent=11 // pred_check
          %p168 = pneg %p38
        $region14: #{tpu_custom_call.1} parent=11 // pred_check_branch
          %170 = sbr.rel (%p168) target = $region16
        $region15: #{tpu_custom_call.1} parent=11 // pred_region
          %s172 = ssub.s32 16, 16
          %173 = vsyncadd [#allocation4], %s172
          %s175 = sshll.u32 %s0, 4
          %s176 = int_to_ptr.vmem [resolvable:$true] %s175
          %178 = dma.vmem_to_smem %s176, 16, [#allocation2], [#allocation4]
        $region16: #{tpu_custom_call.1} parent=11 // pred_fallthru
          _
        // Predicated region
        $region17: #{tpu_custom_call.1} parent=11 // pred_check
          %p179 = pneg %p59
        $region18: #{tpu_custom_call.1} parent=11 // pred_check_branch
          %181 = sbr.rel (%p179) target = $region20
        $region19: #{tpu_custom_call.1} parent=11 // pred_region
          %s183 = ssub.s32 16, 16
          %184 = vsyncadd [#allocation6], %s183
          %s186 = sshll.u32 %s1, 4
          %s187 = int_to_ptr.vmem [resolvable:$true] %s186
          %189 = dma.vmem_to_smem %s187, 16, [#allocation5], [#allocation6]
        $region20: #{tpu_custom_call.1} parent=11 // pred_fallthru
          _
        // Predicated region
        $region21: #{tpu_custom_call.1} parent=11 // pred_check
          %p190 = pneg %p80
        $region22: #{tpu_custom_call.1} parent=11 // pred_check_branch
          %192 = sbr.rel (%p190) target = $region24
        $region23: #{tpu_custom_call.1} parent=11 // pred_region
          _
        $region24: #{tpu_custom_call.1} parent=11 // pred_fallthru
          _
        // Predicated region
        $region25: #{tpu_custom_call.1} parent=11 // pred_check
          %p193 = pneg %p101
        $region26: #{tpu_custom_call.1} parent=11 // pred_check_branch
          %195 = sbr.rel (%p193) target = $region28
        $region27: #{tpu_custom_call.1} parent=11 // pred_region
          _
        $region28: #{tpu_custom_call.1} parent=11 // pred_fallthru
          _
      $region12: #{tpu_custom_call.1} parent=5 // pred_fallthru
        _
      %p196 = scmp.lt.s32.totalorder %s17, 4
      // Predicated region
      $region29: #{tpu_custom_call.1} parent=5 // pred_check
        %p197 = pneg %p196
      $region30: #{tpu_custom_call.1} parent=5 // pred_check_branch
        %199 = sbr.rel (%p197) target = $region32
      $region31: #{tpu_custom_call.1} parent=5 // pred_region
        // Predicated region
        $region33: #{tpu_custom_call.1} parent=31 // pred_check
          %p200 = pneg %p121
        $region34: #{tpu_custom_call.1} parent=31 // pred_check_branch
          %202 = sbr.rel (%p200) target = $region36
        $region35: #{tpu_custom_call.1} parent=31 // pred_region
          %s203 = smul.u32 2, %s17
          %p204 = scmp.lt.s32.totalorder %s203, 7
          %s205 = scalar_select %p204, %s203, 7
          %s206 = smul.addr %s205, 4
          %s207 = scalar_lea.vmem %s4, %s206
          %s208 = smul.u32 2, %s17
        $region36: #{tpu_custom_call.1} parent=31 // pred_fallthru
          _
      $region32: #{tpu_custom_call.1} parent=5 // pred_fallthru
        _
      %p209 = scmp.le.s32.totalorder 1, %s17
      %p210 = scmp.lt.s32.totalorder %s17, 5
      %p211 = pnand %p209, %p210
      %p212 = pneg %p211
      // Predicated region
      $region37: #{tpu_custom_call.1} parent=5 // pred_check
        _
      $region38: #{tpu_custom_call.1} parent=5 // pred_check_branch
        %214 = sbr.rel (%p211) target = $region40
      $region39: #{tpu_custom_call.1} parent=5 // pred_region
        %s215 = ssub.s32 %s17, 1
        // Predicated region
        $region41: #{tpu_custom_call.1} parent=39 // pred_check
          %p216 = pneg %p38
        $region42: #{tpu_custom_call.1} parent=39 // pred_check_branch
          %218 = sbr.rel (%p216) target = $region44
        $region43: #{tpu_custom_call.1} parent=39 // pred_region
          %219 = dma.done [#allocation4], 16
        $region44: #{tpu_custom_call.1} parent=39 // pred_fallthru
          _
        // Predicated region
        $region45: #{tpu_custom_call.1} parent=39 // pred_check
          %p220 = pneg %p59
        $region46: #{tpu_custom_call.1} parent=39 // pred_check_branch
          %222 = sbr.rel (%p220) target = $region48
        $region47: #{tpu_custom_call.1} parent=39 // pred_region
          %223 = dma.done [#allocation6], 16
        $region48: #{tpu_custom_call.1} parent=39 // pred_fallthru
          _
        %224 = sfence
        %p225 = pneg %p38
        %p226 = pneg %p35
        %p227 = pneg %p59
        %p228 = pneg %p56
        %p229 = pneg %p80
        %p230 = pneg %p77
        %p231 = pneg %p101
        %p232 = pneg %p98
        %s233 = smul.u32 2, %s22
        %p234 = scmp.lt.s32.totalorder %s233, 7
        %s235 = scalar_select %p234, %s233, 7
        %s236 = smul.addr %s235, 4
        %s237 = scalar_lea.vmem %s4, %s236
        %p238 = pneg %p127
        %p239 = pneg %p124
        %p240 = pneg %p153
        %p241 = pneg %p150
        %s242 = sand.u32 %s140, 1
        %s243 = scalar_lea.sflag [#allocation3], %s242
        %s244 = sand.u32 %s140, 1
        %s245 = smul.addr %s244, 48
        %s246 = scalar_lea.vmem [#allocation7], %s245
        %s247 = smul.u32 2, %s22
        %p248 = scmp.lt.s32.totalorder %s247, 7
        %s249 = scalar_select %p248, %s247, 7
        %s250 = smul.addr %s249, 4
        %s251 = scalar_lea.vmem %s4, %s250
        %s252 = smul.u32 2, %s22
        %s253 = smul.u32 2, %s22
        %v255 = vld [vmem:[%s251] sm:$0xf]
        %v256 = vld [vmem:[%s251 + $0x4] sm:$0xf]
        %v257 = vld [vmem:[%s2] sm:$0xf]
        %v258 = vld [vmem:[%s2 + $0x4] sm:$0xf]
        %v261 = vunpack.c.l.b16 %v255
        %v262 = vunpack.c.l.b16 %v256
        %v263 = vpack.c.b16 %v262, %v261
        %v266 = vunpack.c.l.b16 %v257
        %v267 = vunpack.c.l.b16 %v258
        %v268 = vpack.c.b16 %v267, %v266
        %vm270 = vcmask 130048
        %v272 = vsel %vm270, %v263, 0
        %274 = vmatprep.subr.bf16.mxu0 0
        %275 = vmatpush1.bf16.msra.mxu0 %v268
        %276 = vmatprep.subr.bf16.mxu0 0
        %277 = vmatpush1.bf16.msra.mxu0 0
        %278 = vmatprep.subr.bf16.mxu0 0
        %279 = vmatpush1.bf16.msra.mxu0 0
        %280 = vmatprep.subr.bf16.mxu0 0
        %281 = vmatpush1.bf16.msra.mxu0 0
        %282 = vmatprep.subr.bf16.mxu0 0
        %283 = vmatpush1.bf16.msra.mxu0 0
        %284 = vmatprep.subr.bf16.mxu0 0
        %285 = vmatpush1.bf16.msra.mxu0 0
        %286 = vmatprep.subr.bf16.mxu0 0
        %287 = vmatpush1.bf16.msra.mxu0 0
        %288 = vmatprep.subr.bf16.mxu0 0
        %289 = vmatpush1.bf16.msra.mxu0 0
        %290 = vmatprep.subr.bf16.mxu0 0
        %291 = vmatpush1.bf16.msra.mxu0 0
        %292 = vmatprep.subr.bf16.mxu0 0
        %293 = vmatpush1.bf16.msra.mxu0 0
        %294 = vmatprep.subr.bf16.mxu0 0
        %295 = vmatpush1.bf16.msra.mxu0 0
        %296 = vmatprep.subr.bf16.mxu0 0
        %297 = vmatpush1.bf16.msra.mxu0 0
        %298 = vmatprep.subr.bf16.mxu0 0
        %299 = vmatpush1.bf16.msra.mxu0 0
        %300 = vmatprep.subr.bf16.mxu0 0
        %301 = vmatpush1.bf16.msra.mxu0 0
        %302 = vmatprep.subr.bf16.mxu0 0
        %303 = vmatpush1.bf16.msra.mxu0 0
        %304 = vmatprep.subr.bf16.mxu0 0
        %305 = vmatpush1.bf16.msra.mxu0 0
        %306 = vmatprep.mubr.bf16.mxu0 0
        %307 = vmatmul.mubr.bf16.gmra.mrb[0].mxu0 %v272
        %v308 = vpop.f32.mrb[0].mxu0
        %v309 = vadd.f32 0.0, %v308
        %v310 = vpop.f32.mrb[0].mxu0
        %v311 = vpop.f32.mrb[0].mxu0
        %v312 = vadd.f32 0.0, %v311
        %v313 = vpop.f32.mrb[0].mxu0
        %314 = vdwg.mxu0
        %s315 = scalar_lea.vmem %s2, 8
        %v316 = vld [vmem:[%s315] sm:$0xf]
        %v317 = vld [vmem:[%s315 + $0x4] sm:$0xf]
        %v320 = vunpack.c.l.b16 %v316
        %v321 = vunpack.c.l.b16 %v317
        %v322 = vpack.c.b16 %v321, %v320
        %324 = vmatprep.subr.bf16.mxu0 0
        %325 = vmatpush1.bf16.msra.mxu0 %v322
        %326 = vmatprep.subr.bf16.mxu0 0
        %327 = vmatpush1.bf16.msra.mxu0 0
        %328 = vmatprep.subr.bf16.mxu0 0
        %329 = vmatpush1.bf16.msra.mxu0 0
        %330 = vmatprep.subr.bf16.mxu0 0
        %331 = vmatpush1.bf16.msra.mxu0 0
        %332 = vmatprep.subr.bf16.mxu0 0
        %333 = vmatpush1.bf16.msra.mxu0 0
        %334 = vmatprep.subr.bf16.mxu0 0
        %335 = vmatpush1.bf16.msra.mxu0 0
        %336 = vmatprep.subr.bf16.mxu0 0
        %337 = vmatpush1.bf16.msra.mxu0 0
        %338 = vmatprep.subr.bf16.mxu0 0
        %339 = vmatpush1.bf16.msra.mxu0 0
        %340 = vmatprep.subr.bf16.mxu0 0
        %341 = vmatpush1.bf16.msra.mxu0 0
        %342 = vmatprep.subr.bf16.mxu0 0
        %343 = vmatpush1.bf16.msra.mxu0 0
        %344 = vmatprep.subr.bf16.mxu0 0
        %345 = vmatpush1.bf16.msra.mxu0 0
        %346 = vmatprep.subr.bf16.mxu0 0
        %347 = vmatpush1.bf16.msra.mxu0 0
        %348 = vmatprep.subr.bf16.mxu0 0
        %349 = vmatpush1.bf16.msra.mxu0 0
        %350 = vmatprep.subr.bf16.mxu0 0
        %351 = vmatpush1.bf16.msra.mxu0 0
        %352 = vmatprep.subr.bf16.mxu0 0
        %353 = vmatpush1.bf16.msra.mxu0 0
        %354 = vmatprep.subr.bf16.mxu0 0
        %355 = vmatpush1.bf16.msra.mxu0 0
        %356 = vmatprep.mubr.bf16.mxu0 0
        %357 = vmatmul.mubr.bf16.gmra.mrb[0].mxu0 %v272
        %v358 = vpop.f32.mrb[0].mxu0
        %v359 = vadd.f32 0.0, %v358
        %v360 = vpop.f32.mrb[0].mxu0
        %v361 = vpop.f32.mrb[0].mxu0
        %v362 = vadd.f32 0.0, %v361
        %v363 = vpop.f32.mrb[0].mxu0
        %364 = vdwg.mxu0
        %s365 = scalar_lea.vmem %s2, 16
        %v366 = vld [vmem:[%s365] sm:$0xf]
        %v367 = vld [vmem:[%s365 + $0x4] sm:$0xf]
        %v370 = vunpack.c.l.b16 %v366
        %v371 = vunpack.c.l.b16 %v367
        %v372 = vpack.c.b16 %v371, %v370
        %374 = vmatprep.subr.bf16.mxu0 0
        %375 = vmatpush1.bf16.msra.mxu0 %v372
        %376 = vmatprep.subr.bf16.mxu0 0
        %377 = vmatpush1.bf16.msra.mxu0 0
        %378 = vmatprep.subr.bf16.mxu0 0
        %379 = vmatpush1.bf16.msra.mxu0 0
        %380 = vmatprep.subr.bf16.mxu0 0
        %381 = vmatpush1.bf16.msra.mxu0 0
        %382 = vmatprep.subr.bf16.mxu0 0
        %383 = vmatpush1.bf16.msra.mxu0 0
        %384 = vmatprep.subr.bf16.mxu0 0
        %385 = vmatpush1.bf16.msra.mxu0 0
        %386 = vmatprep.subr.bf16.mxu0 0
        %387 = vmatpush1.bf16.msra.mxu0 0
        %388 = vmatprep.subr.bf16.mxu0 0
        %389 = vmatpush1.bf16.msra.mxu0 0
        %390 = vmatprep.subr.bf16.mxu0 0
        %391 = vmatpush1.bf16.msra.mxu0 0
        %392 = vmatprep.subr.bf16.mxu0 0
        %393 = vmatpush1.bf16.msra.mxu0 0
        %394 = vmatprep.subr.bf16.mxu0 0
        %395 = vmatpush1.bf16.msra.mxu0 0
        %396 = vmatprep.subr.bf16.mxu0 0
        %397 = vmatpush1.bf16.msra.mxu0 0
        %398 = vmatprep.subr.bf16.mxu0 0
        %399 = vmatpush1.bf16.msra.mxu0 0
        %400 = vmatprep.subr.bf16.mxu0 0
        %401 = vmatpush1.bf16.msra.mxu0 0
        %402 = vmatprep.subr.bf16.mxu0 0
        %403 = vmatpush1.bf16.msra.mxu0 0
        %404 = vmatprep.subr.bf16.mxu0 0
        %405 = vmatpush1.bf16.msra.mxu0 0
        %406 = vmatprep.mubr.bf16.mxu0 0
        %407 = vmatmul.mubr.bf16.gmra.mrb[0].mxu0 %v272
        %v408 = vpop.f32.mrb[0].mxu0
        %v409 = vadd.f32 0.0, %v408
        %v410 = vpop.f32.mrb[0].mxu0
        %v411 = vpop.f32.mrb[0].mxu0
        %v412 = vadd.f32 0.0, %v411
        %v413 = vpop.f32.mrb[0].mxu0
        %414 = vdwg.mxu0
        %v415 = vpack.c.bf16 %v312, %v309
        %v416 = vpack.c.bf16 %v362, %v359
        %v417 = vpack.c.bf16 %v412, %v409
        %v418 = vld [vmem:[%s3] sm:$0xf]
        %v419 = vld [vmem:[%s3 + $0x4] sm:$0xf]
        %v420 = vld [vmem:[%s3 + $0x8] sm:$0x3]
        %v424 = vunpack.c.l.b16 %v418
        %v425 = vunpack.c.l.b16 %v419
        %v426 = vunpack.c.l.b16 %v420
        %v427 = vpack.c.b16 %v425, %v424
        %v428 = vpack.c.b16 %v426, %v426
        %vm430 = vcmask 162816
        %v432 = vsel %vm430, %v415, 0
        %v435 = vsel %vm430, %v416, 0
        %v438 = vsel %vm430, %v417, 0
        %vm440 = vcmask 1041408
        %v442 = vsel %vm440, %v428, 0
        %444 = vmatprep.subr.bf16.mxu0 0
        %445 = vmatpush1.bf16.msra.mxu0 %v427
        %446 = vmatprep.subr.bf16.mxu0 0
        %447 = vmatpush1.bf16.msra.mxu0 %v442
        %448 = vmatprep.subr.bf16.mxu0 0
        %449 = vmatpush1.bf16.msra.mxu0 0
        %450 = vmatprep.subr.bf16.mxu0 0
        %451 = vmatpush1.bf16.msra.mxu0 0
        %452 = vmatprep.subr.bf16.mxu0 0
        %453 = vmatpush1.bf16.msra.mxu0 0
        %454 = vmatprep.subr.bf16.mxu0 0
        %455 = vmatpush1.bf16.msra.mxu0 0
        %456 = vmatprep.subr.bf16.mxu0 0
        %457 = vmatpush1.bf16.msra.mxu0 0
        %458 = vmatprep.subr.bf16.mxu0 0
        %459 = vmatpush1.bf16.msra.mxu0 0
        %460 = vmatprep.subr.bf16.mxu0 0
        %461 = vmatpush1.bf16.msra.mxu0 0
        %462 = vmatprep.subr.bf16.mxu0 0
        %463 = vmatpush1.bf16.msra.mxu0 0
        %464 = vmatprep.subr.bf16.mxu0 0
        %465 = vmatpush1.bf16.msra.mxu0 0
        %466 = vmatprep.subr.bf16.mxu0 0
        %467 = vmatpush1.bf16.msra.mxu0 0
        %468 = vmatprep.subr.bf16.mxu0 0
        %469 = vmatpush1.bf16.msra.mxu0 0
        %470 = vmatprep.subr.bf16.mxu0 0
        %471 = vmatpush1.bf16.msra.mxu0 0
        %472 = vmatprep.subr.bf16.mxu0 0
        %473 = vmatpush1.bf16.msra.mxu0 0
        %474 = vmatprep.subr.bf16.mxu0 0
        %475 = vmatpush1.bf16.msra.mxu0 0
        %476 = vmatprep.mubr.bf16.mxu0 0
        %477 = vmatmul.mubr.bf16.gmra.mrb[0].mxu0 %v432
        %v478 = vpop.f32.mrb[0].mxu0
        %v479 = vadd.f32 0.0, %v478
        %v480 = vpop.f32.mrb[0].mxu0
        %v481 = vpop.f32.mrb[0].mxu0
        %v482 = vadd.f32 0.0, %v481
        %v483 = vpop.f32.mrb[0].mxu0
        %484 = vmatprep.mubr.bf16.mxu0 0
        %485 = vmatmul.mubr.bf16.gmra.mrb[0].mxu0 %v435
        %v486 = vpop.f32.mrb[0].mxu0
        %v487 = vadd.f32 0.0, %v486
        %v488 = vpop.f32.mrb[0].mxu0
        %v489 = vpop.f32.mrb[0].mxu0
        %v490 = vadd.f32 0.0, %v489
        %v491 = vpop.f32.mrb[0].mxu0
        %492 = vmatprep.mubr.bf16.mxu0 0
        %493 = vmatmul.mubr.bf16.gmra.mrb[0].mxu0 %v438
        %v494 = vpop.f32.mrb[0].mxu0
        %v495 = vadd.f32 0.0, %v494
        %v496 = vpop.f32.mrb[0].mxu0
        %v497 = vpop.f32.mrb[0].mxu0
        %v498 = vadd.f32 0.0, %v497
        %v499 = vpop.f32.mrb[0].mxu0
        %500 = vdwg.mxu0
        %s501 = smul.u32 %s22, 16
        %v502 = vlaneseq
        %v503 = vshrl.u32 %v502, 7
        %v504 = vadd.s32 %v503, 8
        %v505 = vstv %s501
        %v506 = vadd.s32 %v505, %v503
        %v507 = vadd.s32 %v505, %v504
        %v508 = vlaneseq
        %v509 = vand.u32 %v508, 127
        %vm510 = vcmp.lt.s32.totalorder %v506, 32
        %vm511 = vcmp.lt.s32.totalorder %v507, 32
        %vm512 = vcmp.lt.s32.totalorder %v509, 40
        %vm513 = vmand %vm510, %vm512
        %vm514 = vmand %vm511, %vm512
        %s515 = sld [smem:[#allocation2]]
        %v516 = vstv %s515
        %v517 = vmul.f32 %v516, %v479
        %v518 = vmul.f32 %v516, %v482
        %s519 = sld [smem:[#allocation5]]
        %v520 = vstv %s519
        %v521 = vadd.f32 %v517, %v520
        %v522 = vadd.f32 %v518, %v520
        %v523 = vsel %vm513, %v521, 0.0
        %v524 = vsel %vm514, %v522, 0.0
        %vm525 = vcmask 523264
        %526 = vst.msk [vmem:[%s246] sm:$0xff] %vm525, %v523
        %527 = vst.msk [vmem:[%s246 + $0x8] sm:$0xff] %vm525, %v524
        %s528 = sld [smem:[#allocation2 + $0x1]]
        %v529 = vstv %s528
        %v530 = vmul.f32 %v529, %v487
        %v531 = vmul.f32 %v529, %v490
        %s532 = sld [smem:[#allocation5 + $0x1]]
        %v533 = vstv %s532
        %v534 = vadd.f32 %v530, %v533
        %v535 = vadd.f32 %v531, %v533
        %v536 = vsel %vm513, %v534, 0.0
        %v537 = vsel %vm514, %v535, 0.0
        %s538 = scalar_lea.vmem %s246, 16 [#allocation7]
        %539 = vst.msk [vmem:[%s538] sm:$0xff] %vm525, %v536
        %540 = vst.msk [vmem:[%s538 + $0x8] sm:$0xff] %vm525, %v537
        %s541 = sld [smem:[#allocation2 + $0x2]]
        %v542 = vstv %s541
        %v543 = vmul.f32 %v542, %v495
        %v544 = vmul.f32 %v542, %v498
        %s545 = sld [smem:[#allocation5 + $0x2]]
        %v546 = vstv %s545
        %v547 = vadd.f32 %v543, %v546
        %v548 = vadd.f32 %v544, %v546
        %v549 = vsel %vm513, %v547, 0.0
        %v550 = vsel %vm514, %v548, 0.0
        %s551 = scalar_lea.vmem %s246, 32 [#allocation7]
        %552 = vst.msk [vmem:[%s551] sm:$0xff] %vm525, %v549
        %553 = vst.msk [vmem:[%s551 + $0x8] sm:$0xff] %vm525, %v550
        %s554 = sand.u32 %s140, 1
        %s555 = scalar_lea.sflag [#allocation3], %s554
        %s556 = sand.u32 %s140, 1
        %s557 = smul.addr %s556, 48
        %s558 = scalar_lea.vmem [#allocation7], %s557
        // Predicated region
        $region49: #{tpu_custom_call.1} parent=39 // pred_check
          %p559 = pneg %p150
        $region50: #{tpu_custom_call.1} parent=39 // pred_check_branch
          %561 = sbr.rel (%p559) target = $region52
        $region51: #{tpu_custom_call.1} parent=39 // pred_region
          #allocation9 [shape = 'u32[6]{0}', space=smem, size = 0x18, scoped, tag = 'DMA stride descriptor']
          %s562 = smul.u32 2, %s22
          %s564 = ssub.s32 768, 768
          %565 = vsyncadd %s555, %s564
          %s566 = smul.addr %s562, 128
          %s567 = scalar_lea.hbm %s6, %s566
          %s569 = sshll.u32 1, 14
          %s570 = sxor.u32 4294967295, %s569
          %s573 = sshll.u32 7, 18
          %s574 = sxor.u32 4294967295, %s573
          %s575 = sand.u32 0, %s574
          %s577 = sor.u32 %s575, 0
          %s579 = sshll.u32 3, 24
          %s580 = sxor.u32 4294967295, %s579
          %s581 = sand.u32 %s577, %s580
          %s583 = sor.u32 %s581, 0
          %s584 = sshll.u32 %s558, 4
          %s585 = int_to_ptr.vmem [resolvable:$true] %s584
          %591 = sst [smem:[#allocation9]] 256
          %s592 = scalar_lea.smem [#allocation9], 1
          %593 = sst [smem:[%s592]] 1024
          %s594 = scalar_lea.smem [#allocation9], 2
          %595 = sst [smem:[%s594]] 2
          %s596 = scalar_lea.smem [#allocation9], 3
          %597 = sst [smem:[%s596]] 128
          %s598 = scalar_lea.smem [#allocation9], 4
          %599 = sst [smem:[%s598]] 128
          %s600 = scalar_lea.smem [#allocation9], 5
          %601 = sst [smem:[%s600]] 8
          %603 = dma.general %s585, 768, %s567, %s555, [#allocation8], [#allocation9], %s583, 0
        $region52: #{tpu_custom_call.1} parent=39 // pred_fallthru
          _
      $region40: #{tpu_custom_call.1} parent=5 // pred_fallthru
        _
      %p604 = scmp.le.s32.totalorder 2, %s17
      // Predicated region
      $region53: #{tpu_custom_call.1} parent=5 // pred_check
        %p605 = pneg %p604
      $region54: #{tpu_custom_call.1} parent=5 // pred_check_branch
        %607 = sbr.rel (%p605) target = $region56
      $region55: #{tpu_custom_call.1} parent=5 // pred_region
        %s608 = ssub.s32 %s17, 2
        // Predicated region
        $region57: #{tpu_custom_call.1} parent=55 // pred_check
          %p609 = pneg %p156
        $region58: #{tpu_custom_call.1} parent=55 // pred_check_branch
          %611 = sbr.rel (%p609) target = $region60
        $region59: #{tpu_custom_call.1} parent=55 // pred_region
          %s612 = sand.u32 %s141, 1
          %s613 = scalar_lea.sflag [#allocation3], %s612
          %s614 = sand.u32 %s141, 1
          %s615 = smul.addr %s614, 48
          %s616 = scalar_lea.vmem [#allocation7], %s615
          %617 = dma.done %s613, 768
        $region60: #{tpu_custom_call.1} parent=55 // pred_fallthru
          _
      $region56: #{tpu_custom_call.1} parent=5 // pred_fallthru
        _
    $region6: #{tpu_custom_call.1} parent=1 // loop_footer
      %s21 = sadd.s32 1, %s17
    $region7: #{tpu_custom_call.1} parent=1 // loop_footer_branch
      %16 = sbr.rel target = $region3
    $region8: #{tpu_custom_call.1} parent=1 // loop_exit
      _
    %618 = vsyncpa [#allocation3], 1
    %s619 = scalar_lea.sflag [#allocation3], 1
    %620 = vsyncpa %s619, 1
    %621 = vsyncpa [#allocation4], 1
    %s622 = scalar_lea.sflag [#allocation4], 1
    %623 = vsyncpa %s622, 1
    %624 = vsyncpa [#allocation6], 1

</llo_original>
